<compile_context>
chip_gen: v7x
topology: tpu7x:2x2x1
jax: 0.10.0
libtpu: 0.0.40
codegen_flags: <defaults>
</compile_context>

<pallas_src>
import jax
import jax.numpy as jnp
from jax.experimental import pallas as pl
from jax.experimental.pallas import tpu as pltpu


def _round_up(n, m):
    return ((n + m - 1) // m) * m


def uncertainty_mlp_kernel(x_ref, w1t_ref, b1c_ref, w2t_ref, b2c_ref, w3c_ref,
                           b3_ref, o_ref):
    """One batch tile of TB columns.  Feature-major: batch lives on the lane axis."""
    # ----- Layer 1: Linear(D -> H) + ReLU (dropout = identity in eval) -----------
    # (H, D) @ (D, TB) -> (H, TB); bf16 (or f32) operands, f32 MXU accumulation.
    h1t = jnp.dot(w1t_ref[...], x_ref[...], preferred_element_type=jnp.float32)
    h1t = jnp.maximum(h1t + b1c_ref[...], 0.0)            # (H, 1) column bias, f32 VPU

    # ----- Layer 2: Linear(H -> H) + ReLU -----------------------------------------
    # (H, H) @ (H, TB) -> (H, TB); re-feed the MXU in the weights' dtype.
    h2t = jnp.dot(w2t_ref[...], h1t.astype(w2t_ref.dtype),
                  preferred_element_type=jnp.float32)
    h2t = jnp.maximum(h2t + b2c_ref[...], 0.0)

    # ----- Layer 3: Linear(H -> 1) as VPU multiply + XLU sublane reduction --------
    # Avoids a near-useless N=1 MXU matmul and directly yields a lane-dense row.
    out_row = jnp.sum(h2t * w3c_ref[...], axis=0, keepdims=True) + b3_ref[0, 0]
    o_ref[...] = out_row.astype(o_ref.dtype)               # (1, TB) unmasked store


def _vmem_budget_bytes():
    """Per-generation scoped-VMEM target, with headroom for Mosaic internal scratch."""
    try:
        phys = pltpu.get_tpu_info().vmem_capacity_bytes
    except Exception:                       # no TPU info available -> assume v7x (64 MiB)
        phys = 64 * 1024 * 1024
    # v7x (64 MiB phys) -> 48 MiB scoped; v5e/v6e (128 MiB phys) -> 96 MiB scoped.
    return int(min(96 * 1024 * 1024, max(32 * 1024 * 1024, phys * 3 // 4)))


def _pick_batch_tile(B, D, H, mxu_bytes, vmem_limit):
    """Largest 128-multiple batch tile (columns of x^T) that fits the VMEM budget."""
    lane = lambda n: _round_up(n, 128)      # lane (last-dim) padding
    sub = lambda n: _round_up(n, 8)         # sublane padding
    # Resident, constant-index operands.  Counted double-buffered (worst case, in
    # case pl.Buffered(1) is unavailable and the default 2-deep pipeline is used).
    resident = 2 * (sub(H) * lane(D) * mxu_bytes          # w1^T
                    + sub(H) * lane(H) * mxu_bytes        # w2^T
                    + 3 * sub(H) * lane(1) * 4)           # b1c, b2c, w3c (f32)
    # Per batch column: double-buffered x column, f32 h1t/h2t live intermediates,
    # double-buffered f32 output column.
    per_col = 2 * sub(D) * mxu_bytes + 2 * sub(H) * 4 + 2 * 8 * 4
    headroom = 4 * 1024 * 1024              # compiler temps / spills
    tb = (vmem_limit - resident - headroom) // per_col
    tb = max(128, (tb // 128) * 128)
    tb = min(tb, 32768)                     # grid-step overhead is amortized long before this
    tb = min(tb, _round_up(B, 128))         # never larger than the (padded) batch
    if B > 256:
        # Keep >= 2 tiles so the 'parallel' batch axis can feed both TensorCores on
        # v7x (harmless on single-TC v5e/v6e).
        tb = min(tb, _round_up(pl.cdiv(B, 2), 128))
    return tb


def _run_pallas(x_t, w1t, b1c, w2t, b2c, w3c, b3s, *, tb, num_tiles, flops,
                bytes_accessed, vmem_limit, single_buffer_weights):
    D, b_pad = x_t.shape
    H = w1t.shape[0]

    def const_spec(shape):
        idx = lambda i, _s=shape: (0,) * len(_s)
        if single_buffer_weights:
            # Fetched exactly once (constant index_map): one VMEM buffer is enough.
            return pl.BlockSpec(shape, idx, pipeline_mode=pl.Buffered(1))
        return pl.BlockSpec(shape, idx)

    return pl.pallas_call(
        uncertainty_mlp_kernel,
        out_shape=jax.ShapeDtypeStruct((1, b_pad), jnp.float32),
        grid=(num_tiles,),
        in_specs=[
            # Streamed / double-buffered (D, TB) tile of x^T -- lane-dense batch.
            pl.BlockSpec((D, tb), lambda i: (0, i)),
            const_spec((H, D)),             # w1^T, VMEM-resident
            const_spec((H, 1)),             # b1 column
            const_spec((H, H)),             # w2^T
            const_spec((H, 1)),             # b2 column
            const_spec((H, 1)),             # w3 column
            # b3: single scalar, keep it on the scalar path.
            pl.BlockSpec(memory_space=pltpu.MemorySpace.SMEM),
        ],
        # Lane-dense (1, TB) output row per tile; wrapper reshapes back to (B, 1).
        out_specs=pl.BlockSpec((1, tb), lambda i: (0, i)),
        compiler_params=pltpu.CompilerParams(
            dimension_semantics=("parallel",),   # independent batch tiles -> both TCs on v7x
            vmem_limit_bytes=int(vmem_limit),
        ),
        cost_estimate=pl.CostEstimate(
            flops=flops, transcendentals=0, bytes_accessed=bytes_accessed),
    )(x_t, w1t, b1c, w2t, b2c, w3c, b3s)


def uncertainty_net_forward(x, params, *, use_bf16=True):
    """Fused 3-layer MLP forward.  x: (B, D) f32 -> (B, 1) f32 (eval-mode dropout)."""
    w1, b1, w2, b2, w3, b3 = params
    B, D = x.shape
    H = w1.shape[1]

    mxu_dtype = jnp.bfloat16 if use_bf16 else jnp.float32
    mxu_bytes = jnp.dtype(mxu_dtype).itemsize

    vmem_limit = _vmem_budget_bytes()
    tb_max = _pick_batch_tile(B, D, H, mxu_bytes, vmem_limit)
    num_tiles = pl.cdiv(B, tb_max)
    # Spread rows evenly across tiles so padding waste is bounded by < one tile.
    tb = _round_up(pl.cdiv(B, num_tiles), 128)
    b_pad = num_tiles * tb

    # Feature-major layout plumbing.  Pad + transpose + bf16 cast fuse into the one
    # HBM pass over x that the transposed orientation needs anyway (under jit).
    if b_pad != B:
        x = jnp.pad(x, ((0, b_pad - B), (0, 0)))
    x_t = x.T.astype(mxu_dtype)                       # (D, b_pad), batch on lanes
    w1t = w1.T.astype(mxu_dtype)                      # (H, D)
    w2t = w2.T.astype(mxu_dtype)                      # (H, H)
    b1c = b1.astype(jnp.float32).reshape(H, 1)        # robust to (H,), (1,H) or (H,1)
    b2c = b2.astype(jnp.float32).reshape(H, 1)
    w3c = w3.astype(jnp.float32).reshape(H, 1)
    b3s = b3.astype(jnp.float32).reshape(1, 1)        # scalar, lives in SMEM

    flops = 2 * b_pad * (D * H + H * H + H)
    bytes_accessed = (mxu_bytes * (b_pad * D + w1.size + w2.size)
                      + 4 * (b_pad + b1.size + b2.size + w3.size + b3.size))

    kwargs = dict(tb=tb, num_tiles=num_tiles, flops=flops,
                  bytes_accessed=bytes_accessed, vmem_limit=vmem_limit)
    try:
        out_row = _run_pallas(x_t, w1t, b1c, w2t, b2c, w3c, b3s,
                              single_buffer_weights=True, **kwargs)
    except Exception:
        # pipeline_mode=pl.Buffered(1) not supported by this JAX build: fall back to
        # the default double-buffered constant specs (VMEM budget already covers it).
        out_row = _run_pallas(x_t, w1t, b1c, w2t, b2c, w3c, b3s,
                              single_buffer_weights=False, **kwargs)

    return out_row[0, :B].reshape(B, 1)


def init_params(key, input_dim, hidden):
    """Deterministic init mimicking PyTorch Linear default (uniform +/- 1/sqrt(fan_in))."""
    def linear(key, fan_in, fan_out):
        kw, kb = jax.random.split(key)
        bound = 1.0 / jnp.sqrt(fan_in)
        w = jax.random.uniform(kw, (fan_in, fan_out), jnp.float32, -bound, bound)
        b = jax.random.uniform(kb, (1, fan_out), jnp.float32, -bound, bound)
        return w, b

    k1, k2, k3 = jax.random.split(key, 3)
    w1, b1 = linear(k1, input_dim, hidden)
    w2, b2 = linear(k2, hidden, hidden)
    w3, b3 = linear(k3, hidden, 1)
    return (w1, b1, w2, b2, w3, b3)


if __name__ == "__main__":
    key = jax.random.PRNGKey(0)
    k_x, k_p = jax.random.split(key)

    batch = 8
    input_dim = 32
    hidden = 64

    x = jax.random.normal(k_x, (batch, input_dim), dtype=jnp.float32)
    params = init_params(k_p, input_dim, hidden)
    w1, b1, w2, b2, w3, b3 = params

    # Pure-JAX f32 reference (eval-mode forward: Dropout = identity).
    ref_f32 = jnp.maximum(x @ w1 + b1, 0.0)
    ref_f32 = jnp.maximum(ref_f32 @ w2 + b2, 0.0)
    ref_f32 = ref_f32 @ w3 + b3

    # dtype-matched reference for the bf16 MXU path (bf16 operands, f32 accumulation).
    xb, w1b, w2b = (t.astype(jnp.bfloat16) for t in (x, w1, w2))
    h1 = jnp.maximum(jnp.dot(xb, w1b, preferred_element_type=jnp.float32) + b1, 0.0)
    h2 = jnp.maximum(jnp.dot(h1.astype(jnp.bfloat16), w2b,
                             preferred_element_type=jnp.float32) + b2, 0.0)
    ref_bf16 = h2 @ w3 + b3

    # f32 MXU path: tight check against the f32 reference.
    out_f32 = jax.block_until_ready(uncertainty_net_forward(x, params, use_bf16=False))
    assert out_f32.shape == (batch, 1)
    assert jnp.allclose(out_f32, ref_f32, atol=1e-4, rtol=1e-4)

    # Default bf16 MXU path: tight check against the dtype-matched reference,
    # loose sanity check against the f32 reference (bf16 inputs, f32 accumulation).
    out = jax.block_until_ready(uncertainty_net_forward(x, params))
    assert out.shape == (batch, 1)
    assert jnp.allclose(out, ref_bf16, atol=5e-3, rtol=5e-3)
    assert jnp.allclose(out, ref_f32, atol=1e-1, rtol=1e-1)

    print("KERNEL_OK")
</pallas_src>

<mosaic_0001>
module attributes {stable_mosaic.version = 11 : i64} {
  func.func @uncertainty_mlp_kernel(%arg0: i32, %arg1: memref<32x128xf32, #tpu.memory_space<vmem>>, %arg2: memref<64x32xf32, #tpu.memory_space<vmem>>, %arg3: memref<64x1xf32, #tpu.memory_space<vmem>>, %arg4: memref<64x64xf32, #tpu.memory_space<vmem>>, %arg5: memref<64x1xf32, #tpu.memory_space<vmem>>, %arg6: memref<64x1xf32, #tpu.memory_space<vmem>>, %arg7: memref<1x1xf32, #tpu.memory_space<smem>>, %arg8: memref<1x128xf32, #tpu.memory_space<vmem>>) attributes {dimension_semantics = [#tpu.dimension_semantics<parallel>], iteration_bounds = array<i64: 1>, scalar_prefetch = 0 : i64, scratch_operands = 0 : i64, tpu.core_type = #tpu.core_type<tc>, window_params = [{transform_indices = @transform_0, window_bounds = array<i64: 32, 128>}, {pipeline_mode = #tpu.pipeline_mode<synchronous>, transform_indices = @transform_1, window_bounds = array<i64: 64, 32>}, {pipeline_mode = #tpu.pipeline_mode<synchronous>, transform_indices = @transform_2, window_bounds = array<i64: 64, 1>}, {pipeline_mode = #tpu.pipeline_mode<synchronous>, transform_indices = @transform_3, window_bounds = array<i64: 64, 64>}, {pipeline_mode = #tpu.pipeline_mode<synchronous>, transform_indices = @transform_4, window_bounds = array<i64: 64, 1>}, {pipeline_mode = #tpu.pipeline_mode<synchronous>, transform_indices = @transform_5, window_bounds = array<i64: 64, 1>}, {transform_indices = @transform_6, window_bounds = array<i64: 1, 1>}, {transform_indices = @transform_7, window_bounds = array<i64: 1, 128>}]} {
    %c0 = arith.constant 0 : index
    %c0_0 = arith.constant 0 : index
    %0 = vector.load %arg2[%c0, %c0_0] : memref<64x32xf32, #tpu.memory_space<vmem>>, vector<64x32xf32>
    %c0_1 = arith.constant 0 : index
    %c0_2 = arith.constant 0 : index
    %1 = vector.load %arg1[%c0_1, %c0_2] : memref<32x128xf32, #tpu.memory_space<vmem>>, vector<32x128xf32>
    %cst = arith.constant dense<0.000000e+00> : vector<64x128xf32>
    %2 = tpu.matmul %0, %1, %cst {dimension_numbers = #tpu.dot_dimension_numbers<[1], [0], [0], [1], [0, 0, 1, 1], [], []>} : vector<64x32xf32>, vector<32x128xf32>, vector<64x128xf32> -> vector<64x128xf32>
    %c0_3 = arith.constant 0 : index
    %c0_4 = arith.constant 0 : index
    %3 = vector.load %arg3[%c0_3, %c0_4] : memref<64x1xf32, #tpu.memory_space<vmem>>, vector<64x1xf32>
    %4 = vector.broadcast %3 : vector<64x1xf32> to vector<64x128xf32>
    %5 = arith.addf %2, %4 : vector<64x128xf32>
    %cst_5 = arith.constant 0.000000e+00 : f32
    %6 = vector.broadcast %cst_5 : f32 to vector<64x128xf32>
    %7 = arith.maximumf %5, %6 : vector<64x128xf32>
    %c0_6 = arith.constant 0 : index
    %c0_7 = arith.constant 0 : index
    %8 = vector.load %arg4[%c0_6, %c0_7] : memref<64x64xf32, #tpu.memory_space<vmem>>, vector<64x64xf32>
    %cst_8 = arith.constant dense<0.000000e+00> : vector<64x128xf32>
    %9 = tpu.matmul %8, %7, %cst_8 {dimension_numbers = #tpu.dot_dimension_numbers<[1], [0], [0], [1], [0, 0, 1, 1], [], []>} : vector<64x64xf32>, vector<64x128xf32>, vector<64x128xf32> -> vector<64x128xf32>
    %c0_9 = arith.constant 0 : index
    %c0_10 = arith.constant 0 : index
    %10 = vector.load %arg5[%c0_9, %c0_10] : memref<64x1xf32, #tpu.memory_space<vmem>>, vector<64x1xf32>
    %11 = vector.broadcast %10 : vector<64x1xf32> to vector<64x128xf32>
    %12 = arith.addf %9, %11 : vector<64x128xf32>
    %cst_11 = arith.constant 0.000000e+00 : f32
    %13 = vector.broadcast %cst_11 : f32 to vector<64x128xf32>
    %14 = arith.maximumf %12, %13 : vector<64x128xf32>
    %c0_12 = arith.constant 0 : index
    %c0_13 = arith.constant 0 : index
    %15 = vector.load %arg6[%c0_12, %c0_13] : memref<64x1xf32, #tpu.memory_space<vmem>>, vector<64x1xf32>
    %16 = vector.broadcast %15 : vector<64x1xf32> to vector<64x128xf32>
    %17 = arith.mulf %14, %16 : vector<64x128xf32>
    %cst_14 = arith.constant dense<0.000000e+00> : vector<128xf32>
    %18 = vector.multi_reduction <add>, %17, %cst_14 [0] : vector<64x128xf32> to vector<128xf32>
    %19 = vector.shape_cast %18 : vector<128xf32> to vector<1x128xf32>
    %c0_15 = arith.constant 0 : index
    %c0_16 = arith.constant 0 : index
    %20 = memref.load %arg7[%c0_15, %c0_16] : memref<1x1xf32, #tpu.memory_space<smem>>
    %21 = vector.broadcast %20 : f32 to vector<1x128xf32>
    %22 = arith.addf %19, %21 : vector<1x128xf32>
    %c0_17 = arith.constant 0 : index
    %c0_18 = arith.constant 0 : index
    %23 = vector.load %arg8[%c0_17, %c0_18] : memref<1x128xf32, #tpu.memory_space<vmem>>, vector<1x128xf32>
    tpu.vector_store %arg8[%c0_17, %c0_18], %22 {strides = array<i32>} : memref<1x128xf32, #tpu.memory_space<vmem>>, vector<1x128xf32>,
    return
  }
  func.func @transform_0(%arg0: i32) -> (i32, i32) {
    %c0_i32 = arith.constant 0 : i32
    %c0_i32_0 = arith.constant 0 : i32
    return %c0_i32, %arg0 : i32, i32
  }
  func.func @transform_1(%arg0: i32) -> (i32, i32) {
    %c0_i32 = arith.constant 0 : i32
    %c0_i32_0 = arith.constant 0 : i32
    %c0_i32_1 = arith.constant 0 : i32
    return %c0_i32, %c0_i32_0 : i32, i32
  }
  func.func @transform_2(%arg0: i32) -> (i32, i32) {
    %c0_i32 = arith.constant 0 : i32
    %c0_i32_0 = arith.constant 0 : i32
    %c0_i32_1 = arith.constant 0 : i32
    return %c0_i32, %c0_i32_0 : i32, i32
  }
  func.func @transform_3(%arg0: i32) -> (i32, i32) {
    %c0_i32 = arith.constant 0 : i32
    %c0_i32_0 = arith.constant 0 : i32
    %c0_i32_1 = arith.constant 0 : i32
    return %c0_i32, %c0_i32_0 : i32, i32
  }
  func.func @transform_4(%arg0: i32) -> (i32, i32) {
    %c0_i32 = arith.constant 0 : i32
    %c0_i32_0 = arith.constant 0 : i32
    %c0_i32_1 = arith.constant 0 : i32
    return %c0_i32, %c0_i32_0 : i32, i32
  }
  func.func @transform_5(%arg0: i32) -> (i32, i32) {
    %c0_i32 = arith.constant 0 : i32
    %c0_i32_0 = arith.constant 0 : i32
    %c0_i32_1 = arith.constant 0 : i32
    return %c0_i32, %c0_i32_0 : i32, i32
  }
  func.func @transform_6(%arg0: i32) -> (i32, i32) {
    %c0_i32 = arith.constant 0 : i32
    %c0_i32_0 = arith.constant 0 : i32
    %c0_i32_1 = arith.constant 0 : i32
    return %c0_i32, %c0_i32_0 : i32, i32
  }
  func.func @transform_7(%arg0: i32) -> (i32, i32) {
    %c0_i32 = arith.constant 0 : i32
    %c0_i32_0 = arith.constant 0 : i32
    return %c0_i32, %arg0 : i32, i32
  }
}

module attributes {stable_mosaic.version = 11 : i64} {
  func.func @uncertainty_mlp_kernel(%arg0: i32, %arg1: memref<32x128xf32, #tpu.memory_space<vmem>>, %arg2: memref<64x32xf32, #tpu.memory_space<vmem>>, %arg3: memref<64x1xf32, #tpu.memory_space<vmem>>, %arg4: memref<64x64xf32, #tpu.memory_space<vmem>>, %arg5: memref<64x1xf32, #tpu.memory_space<vmem>>, %arg6: memref<64x1xf32, #tpu.memory_space<vmem>>, %arg7: memref<1x1xf32, #tpu.memory_space<smem>>, %arg8: memref<1x128xf32, #tpu.memory_space<vmem>>) attributes {dimension_semantics = [#tpu.dimension_semantics<parallel>], iteration_bounds = array<i64: 1>, scalar_prefetch = 0 : i64, scratch_operands = 0 : i64, tpu.core_type = #tpu.core_type<tc>, window_params = [{transform_indices = @transform_0, window_bounds = array<i64: 32, 128>}, {pipeline_mode = #tpu.pipeline_mode<synchronous>, transform_indices = @transform_1, window_bounds = array<i64: 64, 32>}, {pipeline_mode = #tpu.pipeline_mode<synchronous>, transform_indices = @transform_2, window_bounds = array<i64: 64, 1>}, {pipeline_mode = #tpu.pipeline_mode<synchronous>, transform_indices = @transform_3, window_bounds = array<i64: 64, 64>}, {pipeline_mode = #tpu.pipeline_mode<synchronous>, transform_indices = @transform_4, window_bounds = array<i64: 64, 1>}, {pipeline_mode = #tpu.pipeline_mode<synchronous>, transform_indices = @transform_5, window_bounds = array<i64: 64, 1>}, {transform_indices = @transform_6, window_bounds = array<i64: 1, 1>}, {transform_indices = @transform_7, window_bounds = array<i64: 1, 128>}]} {
    %c0 = arith.constant 0 : index
    %c0_0 = arith.constant 0 : index
    %0 = vector.load %arg2[%c0, %c0_0] : memref<64x32xf32, #tpu.memory_space<vmem>>, vector<64x32xf32>
    %c0_1 = arith.constant 0 : index
    %c0_2 = arith.constant 0 : index
    %1 = vector.load %arg1[%c0_1, %c0_2] : memref<32x128xf32, #tpu.memory_space<vmem>>, vector<32x128xf32>
    %cst = arith.constant dense<0.000000e+00> : vector<64x128xf32>
    %2 = tpu.matmul %0, %1, %cst {dimension_numbers = #tpu.dot_dimension_numbers<[1], [0], [0], [1], [0, 0, 1, 1], [], []>} : vector<64x32xf32>, vector<32x128xf32>, vector<64x128xf32> -> vector<64x128xf32>
    %c0_3 = arith.constant 0 : index
    %c0_4 = arith.constant 0 : index
    %3 = vector.load %arg3[%c0_3, %c0_4] : memref<64x1xf32, #tpu.memory_space<vmem>>, vector<64x1xf32>
    %4 = vector.broadcast %3 : vector<64x1xf32> to vector<64x128xf32>
    %5 = arith.addf %2, %4 : vector<64x128xf32>
    %cst_5 = arith.constant 0.000000e+00 : f32
    %6 = vector.broadcast %cst_5 : f32 to vector<64x128xf32>
    %7 = arith.maximumf %5, %6 : vector<64x128xf32>
    %c0_6 = arith.constant 0 : index
    %c0_7 = arith.constant 0 : index
    %8 = vector.load %arg4[%c0_6, %c0_7] : memref<64x64xf32, #tpu.memory_space<vmem>>, vector<64x64xf32>
    %cst_8 = arith.constant dense<0.000000e+00> : vector<64x128xf32>
    %9 = tpu.matmul %8, %7, %cst_8 {dimension_numbers = #tpu.dot_dimension_numbers<[1], [0], [0], [1], [0, 0, 1, 1], [], []>} : vector<64x64xf32>, vector<64x128xf32>, vector<64x128xf32> -> vector<64x128xf32>
    %c0_9 = arith.constant 0 : index
    %c0_10 = arith.constant 0 : index
    %10 = vector.load %arg5[%c0_9, %c0_10] : memref<64x1xf32, #tpu.memory_space<vmem>>, vector<64x1xf32>
    %11 = vector.broadcast %10 : vector<64x1xf32> to vector<64x128xf32>
    %12 = arith.addf %9, %11 : vector<64x128xf32>
    %cst_11 = arith.constant 0.000000e+00 : f32
    %13 = vector.broadcast %cst_11 : f32 to vector<64x128xf32>
    %14 = arith.maximumf %12, %13 : vector<64x128xf32>
    %c0_12 = arith.constant 0 : index
    %c0_13 = arith.constant 0 : index
    %15 = vector.load %arg6[%c0_12, %c0_13] : memref<64x1xf32, #tpu.memory_space<vmem>>, vector<64x1xf32>
    %16 = vector.broadcast %15 : vector<64x1xf32> to vector<64x128xf32>
    %17 = arith.mulf %14, %16 : vector<64x128xf32>
    %cst_14 = arith.constant dense<0.000000e+00> : vector<128xf32>
    %18 = vector.multi_reduction <add>, %17, %cst_14 [0] : vector<64x128xf32> to vector<128xf32>
    %19 = vector.shape_cast %18 : vector<128xf32> to vector<1x128xf32>
    %c0_15 = arith.constant 0 : index
    %c0_16 = arith.constant 0 : index
    %20 = memref.load %arg7[%c0_15, %c0_16] : memref<1x1xf32, #tpu.memory_space<smem>>
    %21 = vector.broadcast %20 : f32 to vector<1x128xf32>
    %22 = arith.addf %19, %21 : vector<1x128xf32>
    %c0_17 = arith.constant 0 : index
    %c0_18 = arith.constant 0 : index
    %23 = vector.load %arg8[%c0_17, %c0_18] : memref<1x128xf32, #tpu.memory_space<vmem>>, vector<1x128xf32>
    tpu.vector_store %arg8[%c0_17, %c0_18], %22 {strides = array<i32>} : memref<1x128xf32, #tpu.memory_space<vmem>>, vector<1x128xf32>,
    return
  }
  func.func @transform_0(%arg0: i32) -> (i32, i32) {
    %c0_i32 = arith.constant 0 : i32
    %c0_i32_0 = arith.constant 0 : i32
    return %c0_i32, %arg0 : i32, i32
  }
  func.func @transform_1(%arg0: i32) -> (i32, i32) {
    %c0_i32 = arith.constant 0 : i32
    %c0_i32_0 = arith.constant 0 : i32
    %c0_i32_1 = arith.constant 0 : i32
    return %c0_i32, %c0_i32_0 : i32, i32
  }
  func.func @transform_2(%arg0: i32) -> (i32, i32) {
    %c0_i32 = arith.constant 0 : i32
    %c0_i32_0 = arith.constant 0 : i32
    %c0_i32_1 = arith.constant 0 : i32
    return %c0_i32, %c0_i32_0 : i32, i32
  }
  func.func @transform_3(%arg0: i32) -> (i32, i32) {
    %c0_i32 = arith.constant 0 : i32
    %c0_i32_0 = arith.constant 0 : i32
    %c0_i32_1 = arith.constant 0 : i32
    return %c0_i32, %c0_i32_0 : i32, i32
  }
  func.func @transform_4(%arg0: i32) -> (i32, i32) {
    %c0_i32 = arith.constant 0 : i32
    %c0_i32_0 = arith.constant 0 : i32
    %c0_i32_1 = arith.constant 0 : i32
    return %c0_i32, %c0_i32_0 : i32, i32
  }
  func.func @transform_5(%arg0: i32) -> (i32, i32) {
    %c0_i32 = arith.constant 0 : i32
    %c0_i32_0 = arith.constant 0 : i32
    %c0_i32_1 = arith.constant 0 : i32
    return %c0_i32, %c0_i32_0 : i32, i32
  }
  func.func @transform_6(%arg0: i32) -> (i32, i32) {
    %c0_i32 = arith.constant 0 : i32
    %c0_i32_0 = arith.constant 0 : i32
    %c0_i32_1 = arith.constant 0 : i32
    return %c0_i32, %c0_i32_0 : i32, i32
  }
  func.func @transform_7(%arg0: i32) -> (i32, i32) {
    %c0_i32 = arith.constant 0 : i32
    %c0_i32_0 = arith.constant 0 : i32
    return %c0_i32, %arg0 : i32, i32
  }
}

</mosaic_0001>

<llo_original>
// kernel: tpu_custom_call.1
$region0: #{tpu_custom_call.1}
  #allocation0 [shape = 'u32[]', space=smem, size = 0x4, offset = 0x4, fixed_abs, tag = 'smem constant byte address 0x4 - core index']
  #allocation1 [shape = 'u32[144,128]{1,0:T(1,128)}', space=vmem, size = 0x12000, scoped, tag = 'internal scratch']
  #allocation2 [shape = 'f32[1,1]{1,0:T(1,128)S(6)}', space=smem, size = 0x200, scoped, tag = 'scoped memory for tpu_custom_call.1']
  %s0 = inlined_call_operand.vmem [shape: f32[32,128], index: 0, kind: input, shape index: {}]
  %s1 = inlined_call_operand.vmem [shape: f32[64,32], index: 1, kind: input, shape index: {}]
  %s2 = inlined_call_operand.vmem [shape: f32[64,1], index: 2, kind: input, shape index: {}]
  %s3 = inlined_call_operand.vmem [shape: f32[64,64], index: 3, kind: input, shape index: {}]
  %s4 = inlined_call_operand.vmem [shape: f32[64,1], index: 4, kind: input, shape index: {}]
  %s5 = inlined_call_operand.vmem [shape: f32[64,1], index: 5, kind: input, shape index: {}]
  %s6 = inlined_call_operand.<no memory space> [shape: f32[1,1], index: 6, kind: input, shape index: {}]
  %s7 = inlined_call_operand.hbm [shape: f32[1,128], index: 7, kind: output, shape index: {}]
  %s8 = sld [smem:[#allocation0]]
  $region38: #{tpu_custom_call.1} parent=0
    _
  %s10 = ssub.s32 1, %s8
  %s11 = scalar_select 0, %s10, %s8
  %12 = sst [smem:[#allocation2]] %s6
  $region1: #{tpu_custom_call.1} parent=0
    #allocation3 [shape = 'u8[512]{0}', space=vmem, size = 0x400, scoped, tag = 'output window, operand 0, single buffered']
    #allocation4 [shape = 's32[1]{0}', space=sflag, size = 0x4, scoped, tag = 'scoped memory for tpu_custom_call.1']
    %13 = vsyncpa [#allocation4], 0
    // Predicated region
    $region2: #{tpu_custom_call.1} parent=1 // pred_check
      _
    $region3: #{tpu_custom_call.1} parent=1 // pred_check_branch
      %15 = sbr.rel (0) target = $region5
    $region4: #{tpu_custom_call.1} parent=1 // pred_region
      _
    $region5: #{tpu_custom_call.1} parent=1 // pred_fallthru
      _
    // Predicated region
    $region6: #{tpu_custom_call.1} parent=1 // pred_check
      _
    $region7: #{tpu_custom_call.1} parent=1 // pred_check_branch
      %17 = sbr.rel (0) target = $region9
    $region8: #{tpu_custom_call.1} parent=1 // pred_region
      _
    $region9: #{tpu_custom_call.1} parent=1 // pred_fallthru
      _
    // Predicated region
    $region10: #{tpu_custom_call.1} parent=1 // pred_check
      _
    $region11: #{tpu_custom_call.1} parent=1 // pred_check_branch
      %19 = sbr.rel (0) target = $region13
    $region12: #{tpu_custom_call.1} parent=1 // pred_region
      _
    $region13: #{tpu_custom_call.1} parent=1 // pred_fallthru
      _
    // Predicated region
    $region14: #{tpu_custom_call.1} parent=1 // pred_check
      _
    $region15: #{tpu_custom_call.1} parent=1 // pred_check_branch
      %21 = sbr.rel (0) target = $region17
    $region16: #{tpu_custom_call.1} parent=1 // pred_region
      _
    $region17: #{tpu_custom_call.1} parent=1 // pred_fallthru
      _
    // Predicated region
    $region18: #{tpu_custom_call.1} parent=1 // pred_check
      _
    $region19: #{tpu_custom_call.1} parent=1 // pred_check_branch
      %23 = sbr.rel (0) target = $region21
    $region20: #{tpu_custom_call.1} parent=1 // pred_region
      _
    $region21: #{tpu_custom_call.1} parent=1 // pred_fallthru
      _
    // Predicated region
    $region22: #{tpu_custom_call.1} parent=1 // pred_check
      _
    $region23: #{tpu_custom_call.1} parent=1 // pred_check_branch
      %25 = sbr.rel (0) target = $region25
    $region24: #{tpu_custom_call.1} parent=1 // pred_region
      _
    $region25: #{tpu_custom_call.1} parent=1 // pred_fallthru
      _
    // Predicated region
    $region26: #{tpu_custom_call.1} parent=1 // pred_check
      _
    $region27: #{tpu_custom_call.1} parent=1 // pred_check_branch
      %27 = sbr.rel (0) target = $region29
    $region28: #{tpu_custom_call.1} parent=1 // pred_region
      _
    $region29: #{tpu_custom_call.1} parent=1 // pred_fallthru
      _
    %v28 = vld [vmem:[%s1] sm:$0xff]
    %v29 = vld [vmem:[%s1 + $0x8] sm:$0xff]
    %v30 = vld [vmem:[%s1 + $0x10] sm:$0xff]
    %v31 = vld [vmem:[%s1 + $0x18] sm:$0xff]
    %v32 = vld [vmem:[%s1 + $0x20] sm:$0xff]
    %v33 = vld [vmem:[%s1 + $0x28] sm:$0xff]
    %v34 = vld [vmem:[%s1 + $0x30] sm:$0xff]
    %v35 = vld [vmem:[%s1 + $0x38] sm:$0xff]
    %v36 = vld [vmem:[%s0] sm:$0xff]
    %v37 = vld [vmem:[%s0 + $0x8] sm:$0xff]
    %v38 = vld [vmem:[%s0 + $0x10] sm:$0xff]
    %v39 = vld [vmem:[%s0 + $0x18] sm:$0xff]
    %v40 = vld [vmem:[%s2] sm:$0xff]
    %v41 = vld [vmem:[%s2 + $0x8] sm:$0xff]
    %v42 = vld [vmem:[%s2 + $0x10] sm:$0xff]
    %v43 = vld [vmem:[%s2 + $0x18] sm:$0xff]
    %v44 = vld [vmem:[%s2 + $0x20] sm:$0xff]
    %v45 = vld [vmem:[%s2 + $0x28] sm:$0xff]
    %v46 = vld [vmem:[%s2 + $0x30] sm:$0xff]
    %v47 = vld [vmem:[%s2 + $0x38] sm:$0xff]
    %49 = vset.pattern.permute.xlu0 0
    %50 = vperm.xlu0 %49, %v40
    %v51 = vpop.permute.xlu0 %50
    %54 = vset.pattern.permute.xlu0 0
    %55 = vperm.xlu0 %54, %v41
    %v56 = vpop.permute.xlu0 %55
    %59 = vset.pattern.permute.xlu0 0
    %60 = vperm.xlu0 %59, %v42
    %v61 = vpop.permute.xlu0 %60
    %64 = vset.pattern.permute.xlu0 0
    %65 = vperm.xlu0 %64, %v43
    %v66 = vpop.permute.xlu0 %65
    %69 = vset.pattern.permute.xlu0 0
    %70 = vperm.xlu0 %69, %v44
    %v71 = vpop.permute.xlu0 %70
    %74 = vset.pattern.permute.xlu0 0
    %75 = vperm.xlu0 %74, %v45
    %v76 = vpop.permute.xlu0 %75
    %79 = vset.pattern.permute.xlu0 0
    %80 = vperm.xlu0 %79, %v46
    %v81 = vpop.permute.xlu0 %80
    %84 = vset.pattern.permute.xlu0 0
    %85 = vperm.xlu0 %84, %v47
    %v86 = vpop.permute.xlu0 %85
    %vm88 = vcmask 261120
    %v90 = vsel %vm88, %v28, 0
    %v93 = vsel %vm88, %v29, 0
    %v96 = vsel %vm88, %v30, 0
    %v99 = vsel %vm88, %v31, 0
    %v102 = vsel %vm88, %v32, 0
    %v105 = vsel %vm88, %v33, 0
    %v108 = vsel %vm88, %v34, 0
    %v111 = vsel %vm88, %v35, 0
    %113 = vmatprep.subr.mxu0 0.0
    %114 = vmatpush1.msra.mxu0 %v36
    %115 = vmatprep.subr.mxu0 0.0
    %116 = vmatpush1.msra.mxu0 %v37
    %117 = vmatprep.subr.mxu0 0.0
    %118 = vmatpush1.msra.mxu0 %v38
    %119 = vmatprep.subr.mxu0 0.0
    %120 = vmatpush1.msra.mxu0 %v39
    %121 = vmatprep.subr.mxu0 0.0
    %122 = vmatpush1.msra.mxu0 0.0
    %123 = vmatprep.subr.mxu0 0.0
    %124 = vmatpush1.msra.mxu0 0.0
    %125 = vmatprep.subr.mxu0 0.0
    %126 = vmatpush1.msra.mxu0 0.0
    %127 = vmatprep.subr.mxu0 0.0
    %128 = vmatpush1.msra.mxu0 0.0
    %129 = vmatprep.subr.mxu0 0.0
    %130 = vmatpush1.msra.mxu0 0.0
    %131 = vmatprep.subr.mxu0 0.0
    %132 = vmatpush1.msra.mxu0 0.0
    %133 = vmatprep.subr.mxu0 0.0
    %134 = vmatpush1.msra.mxu0 0.0
    %135 = vmatprep.subr.mxu0 0.0
    %136 = vmatpush1.msra.mxu0 0.0
    %137 = vmatprep.subr.mxu0 0.0
    %138 = vmatpush1.msra.mxu0 0.0
    %139 = vmatprep.subr.mxu0 0.0
    %140 = vmatpush1.msra.mxu0 0.0
    %141 = vmatprep.subr.mxu0 0.0
    %142 = vmatpush1.msra.mxu0 0.0
    %143 = vmatprep.subr.mxu0 0.0
    %144 = vmatpush1.msra.mxu0 0.0
    %145 = vmatprep.subr.mxu0 0.0
    %146 = vmatpush1.msra.mxu0 0.0
    %147 = vmatprep.subr.mxu0 0.0
    %148 = vmatpush1.msra.mxu0 0.0
    %149 = vmatprep.subr.mxu0 0.0
    %150 = vmatpush1.msra.mxu0 0.0
    %151 = vmatprep.subr.mxu0 0.0
    %152 = vmatpush1.msra.mxu0 0.0
    %153 = vmatprep.subr.mxu0 0.0
    %154 = vmatpush1.msra.mxu0 0.0
    %155 = vmatprep.subr.mxu0 0.0
    %156 = vmatpush1.msra.mxu0 0.0
    %157 = vmatprep.subr.mxu0 0.0
    %158 = vmatpush1.msra.mxu0 0.0
    %159 = vmatprep.subr.mxu0 0.0
    %160 = vmatpush1.msra.mxu0 0.0
    %161 = vmatprep.subr.mxu0 0.0
    %162 = vmatpush1.msra.mxu0 0.0
    %163 = vmatprep.subr.mxu0 0.0
    %164 = vmatpush1.msra.mxu0 0.0
    %165 = vmatprep.subr.mxu0 0.0
    %166 = vmatpush1.msra.mxu0 0.0
    %167 = vmatprep.subr.mxu0 0.0
    %168 = vmatpush1.msra.mxu0 0.0
    %169 = vmatprep.subr.mxu0 0.0
    %170 = vmatpush1.msra.mxu0 0.0
    %171 = vmatprep.subr.mxu0 0.0
    %172 = vmatpush1.msra.mxu0 0.0
    %173 = vmatprep.subr.mxu0 0.0
    %174 = vmatpush1.msra.mxu0 0.0
    %175 = vmatprep.subr.mxu0 0.0
    %176 = vmatpush1.msra.mxu0 0.0
    %177 = vmatprep.mubr.f32.mxu0 0.0
    %178 = vmatmul.mubr.f32.gmra.mrb[0].mxu0 %v90
    %v179 = vpop.f32.mrb[0].mxu0
    %v180 = vadd.f32 %v51, %v179
    %v181 = vpop.f32.mrb[0].mxu0
    %182 = vmatprep.mubr.f32.mxu0 0.0
    %183 = vmatmul.mubr.f32.gmra.mrb[0].mxu0 %v93
    %v184 = vpop.f32.mrb[0].mxu0
    %v185 = vadd.f32 %v56, %v184
    %v186 = vpop.f32.mrb[0].mxu0
    %187 = vmatprep.mubr.f32.mxu0 0.0
    %188 = vmatmul.mubr.f32.gmra.mrb[0].mxu0 %v96
    %v189 = vpop.f32.mrb[0].mxu0
    %v190 = vadd.f32 %v61, %v189
    %v191 = vpop.f32.mrb[0].mxu0
    %192 = vmatprep.mubr.f32.mxu0 0.0
    %193 = vmatmul.mubr.f32.gmra.mrb[0].mxu0 %v99
    %v194 = vpop.f32.mrb[0].mxu0
    %v195 = vadd.f32 %v66, %v194
    %v196 = vpop.f32.mrb[0].mxu0
    %197 = vmatprep.mubr.f32.mxu0 0.0
    %198 = vmatmul.mubr.f32.gmra.mrb[0].mxu0 %v102
    %v199 = vpop.f32.mrb[0].mxu0
    %v200 = vadd.f32 %v71, %v199
    %v201 = vpop.f32.mrb[0].mxu0
    %202 = vmatprep.mubr.f32.mxu0 0.0
    %203 = vmatmul.mubr.f32.gmra.mrb[0].mxu0 %v105
    %v204 = vpop.f32.mrb[0].mxu0
    %v205 = vadd.f32 %v76, %v204
    %v206 = vpop.f32.mrb[0].mxu0
    %207 = vmatprep.mubr.f32.mxu0 0.0
    %208 = vmatmul.mubr.f32.gmra.mrb[0].mxu0 %v108
    %v209 = vpop.f32.mrb[0].mxu0
    %v210 = vadd.f32 %v81, %v209
    %v211 = vpop.f32.mrb[0].mxu0
    %212 = vmatprep.mubr.f32.mxu0 0.0
    %213 = vmatmul.mubr.f32.gmra.mrb[0].mxu0 %v111
    %v214 = vpop.f32.mrb[0].mxu0
    %v215 = vadd.f32 %v86, %v214
    %v216 = vpop.f32.mrb[0].mxu0
    %217 = vdwg.mxu0
    %v218 = vmax.f32 %v180, 0.0
    %v219 = vmax.f32 %v185, 0.0
    %v220 = vmax.f32 %v190, 0.0
    %v221 = vmax.f32 %v195, 0.0
    %v222 = vmax.f32 %v200, 0.0
    %v223 = vmax.f32 %v205, 0.0
    %v224 = vmax.f32 %v210, 0.0
    %v225 = vmax.f32 %v215, 0.0
    %v226 = vld [vmem:[%s3] sm:$0xff]
    %v227 = vld [vmem:[%s3 + $0x8] sm:$0xff]
    %v228 = vld [vmem:[%s3 + $0x10] sm:$0xff]
    %v229 = vld [vmem:[%s3 + $0x18] sm:$0xff]
    %v230 = vld [vmem:[%s3 + $0x20] sm:$0xff]
    %v231 = vld [vmem:[%s3 + $0x28] sm:$0xff]
    %v232 = vld [vmem:[%s3 + $0x30] sm:$0xff]
    %v233 = vld [vmem:[%s3 + $0x38] sm:$0xff]
    %v234 = vld [vmem:[%s4] sm:$0xff]
    %v235 = vld [vmem:[%s4 + $0x8] sm:$0xff]
    %v236 = vld [vmem:[%s4 + $0x10] sm:$0xff]
    %v237 = vld [vmem:[%s4 + $0x18] sm:$0xff]
    %v238 = vld [vmem:[%s4 + $0x20] sm:$0xff]
    %v239 = vld [vmem:[%s4 + $0x28] sm:$0xff]
    %v240 = vld [vmem:[%s4 + $0x30] sm:$0xff]
    %v241 = vld [vmem:[%s4 + $0x38] sm:$0xff]
    %243 = vset.pattern.permute.xlu0 0
    %244 = vperm.xlu0 %243, %v234
    %v245 = vpop.permute.xlu0 %244
    %248 = vset.pattern.permute.xlu0 0
    %249 = vperm.xlu0 %248, %v235
    %v250 = vpop.permute.xlu0 %249
    %253 = vset.pattern.permute.xlu0 0
    %254 = vperm.xlu0 %253, %v236
    %v255 = vpop.permute.xlu0 %254
    %258 = vset.pattern.permute.xlu0 0
    %259 = vperm.xlu0 %258, %v237
    %v260 = vpop.permute.xlu0 %259
    %263 = vset.pattern.permute.xlu0 0
    %264 = vperm.xlu0 %263, %v238
    %v265 = vpop.permute.xlu0 %264
    %268 = vset.pattern.permute.xlu0 0
    %269 = vperm.xlu0 %268, %v239
    %v270 = vpop.permute.xlu0 %269
    %273 = vset.pattern.permute.xlu0 0
    %274 = vperm.xlu0 %273, %v240
    %v275 = vpop.permute.xlu0 %274
    %278 = vset.pattern.permute.xlu0 0
    %279 = vperm.xlu0 %278, %v241
    %v280 = vpop.permute.xlu0 %279
    %vm282 = vcmask 523264
    %v284 = vsel %vm282, %v226, 0
    %v287 = vsel %vm282, %v227, 0
    %v290 = vsel %vm282, %v228, 0
    %v293 = vsel %vm282, %v229, 0
    %v296 = vsel %vm282, %v230, 0
    %v299 = vsel %vm282, %v231, 0
    %v302 = vsel %vm282, %v232, 0
    %v305 = vsel %vm282, %v233, 0
    %307 = vmatprep.subr.mxu0 0.0
    %308 = vmatpush1.msra.mxu0 %v218
    %309 = vmatprep.subr.mxu0 0.0
    %310 = vmatpush1.msra.mxu0 %v219
    %311 = vmatprep.subr.mxu0 0.0
    %312 = vmatpush1.msra.mxu0 %v220
    %313 = vmatprep.subr.mxu0 0.0
    %314 = vmatpush1.msra.mxu0 %v221
    %315 = vmatprep.subr.mxu0 0.0
    %316 = vmatpush1.msra.mxu0 %v222
    %317 = vmatprep.subr.mxu0 0.0
    %318 = vmatpush1.msra.mxu0 %v223
    %319 = vmatprep.subr.mxu0 0.0
    %320 = vmatpush1.msra.mxu0 %v224
    %321 = vmatprep.subr.mxu0 0.0
    %322 = vmatpush1.msra.mxu0 %v225
    %323 = vmatprep.subr.mxu0 0.0
    %324 = vmatpush1.msra.mxu0 0.0
    %325 = vmatprep.subr.mxu0 0.0
    %326 = vmatpush1.msra.mxu0 0.0
    %327 = vmatprep.subr.mxu0 0.0
    %328 = vmatpush1.msra.mxu0 0.0
    %329 = vmatprep.subr.mxu0 0.0
    %330 = vmatpush1.msra.mxu0 0.0
    %331 = vmatprep.subr.mxu0 0.0
    %332 = vmatpush1.msra.mxu0 0.0
    %333 = vmatprep.subr.mxu0 0.0
    %334 = vmatpush1.msra.mxu0 0.0
    %335 = vmatprep.subr.mxu0 0.0
    %336 = vmatpush1.msra.mxu0 0.0
    %337 = vmatprep.subr.mxu0 0.0
    %338 = vmatpush1.msra.mxu0 0.0
    %339 = vmatprep.subr.mxu0 0.0
    %340 = vmatpush1.msra.mxu0 0.0
    %341 = vmatprep.subr.mxu0 0.0
    %342 = vmatpush1.msra.mxu0 0.0
    %343 = vmatprep.subr.mxu0 0.0
    %344 = vmatpush1.msra.mxu0 0.0
    %345 = vmatprep.subr.mxu0 0.0
    %346 = vmatpush1.msra.mxu0 0.0
    %347 = vmatprep.subr.mxu0 0.0
    %348 = vmatpush1.msra.mxu0 0.0
    %349 = vmatprep.subr.mxu0 0.0
    %350 = vmatpush1.msra.mxu0 0.0
    %351 = vmatprep.subr.mxu0 0.0
    %352 = vmatpush1.msra.mxu0 0.0
    %353 = vmatprep.subr.mxu0 0.0
    %354 = vmatpush1.msra.mxu0 0.0
    %355 = vmatprep.subr.mxu0 0.0
    %356 = vmatpush1.msra.mxu0 0.0
    %357 = vmatprep.subr.mxu0 0.0
    %358 = vmatpush1.msra.mxu0 0.0
    %359 = vmatprep.subr.mxu0 0.0
    %360 = vmatpush1.msra.mxu0 0.0
    %361 = vmatprep.subr.mxu0 0.0
    %362 = vmatpush1.msra.mxu0 0.0
    %363 = vmatprep.subr.mxu0 0.0
    %364 = vmatpush1.msra.mxu0 0.0
    %365 = vmatprep.subr.mxu0 0.0
    %366 = vmatpush1.msra.mxu0 0.0
    %367 = vmatprep.subr.mxu0 0.0
    %368 = vmatpush1.msra.mxu0 0.0
    %369 = vmatprep.subr.mxu0 0.0
    %370 = vmatpush1.msra.mxu0 0.0
    %371 = vmatprep.mubr.f32.mxu0 0.0
    %372 = vmatmul.mubr.f32.gmra.mrb[0].mxu0 %v284
    %v373 = vpop.f32.mrb[0].mxu0
    %v374 = vadd.f32 %v245, %v373
    %v375 = vpop.f32.mrb[0].mxu0
    %376 = vmatprep.mubr.f32.mxu0 0.0
    %377 = vmatmul.mubr.f32.gmra.mrb[0].mxu0 %v287
    %v378 = vpop.f32.mrb[0].mxu0
    %v379 = vadd.f32 %v250, %v378
    %v380 = vpop.f32.mrb[0].mxu0
    %381 = vmatprep.mubr.f32.mxu0 0.0
    %382 = vmatmul.mubr.f32.gmra.mrb[0].mxu0 %v290
    %v383 = vpop.f32.mrb[0].mxu0
    %v384 = vadd.f32 %v255, %v383
    %v385 = vpop.f32.mrb[0].mxu0
    %386 = vmatprep.mubr.f32.mxu0 0.0
    %387 = vmatmul.mubr.f32.gmra.mrb[0].mxu0 %v293
    %v388 = vpop.f32.mrb[0].mxu0
    %v389 = vadd.f32 %v260, %v388
    %v390 = vpop.f32.mrb[0].mxu0
    %391 = vmatprep.mubr.f32.mxu0 0.0
    %392 = vmatmul.mubr.f32.gmra.mrb[0].mxu0 %v296
    %v393 = vpop.f32.mrb[0].mxu0
    %v394 = vadd.f32 %v265, %v393
    %v395 = vpop.f32.mrb[0].mxu0
    %396 = vmatprep.mubr.f32.mxu0 0.0
    %397 = vmatmul.mubr.f32.gmra.mrb[0].mxu0 %v299
    %v398 = vpop.f32.mrb[0].mxu0
    %v399 = vadd.f32 %v270, %v398
    %v400 = vpop.f32.mrb[0].mxu0
    %401 = vmatprep.mubr.f32.mxu0 0.0
    %402 = vmatmul.mubr.f32.gmra.mrb[0].mxu0 %v302
    %v403 = vpop.f32.mrb[0].mxu0
    %v404 = vadd.f32 %v275, %v403
    %v405 = vpop.f32.mrb[0].mxu0
    %406 = vmatprep.mubr.f32.mxu0 0.0
    %407 = vmatmul.mubr.f32.gmra.mrb[0].mxu0 %v305
    %v408 = vpop.f32.mrb[0].mxu0
    %v409 = vadd.f32 %v280, %v408
    %v410 = vpop.f32.mrb[0].mxu0
    %411 = vdwg.mxu0
    %v412 = vmax.f32 %v374, 0.0
    %v413 = vmax.f32 %v379, 0.0
    %v414 = vmax.f32 %v384, 0.0
    %v415 = vmax.f32 %v389, 0.0
    %v416 = vmax.f32 %v394, 0.0
    %v417 = vmax.f32 %v399, 0.0
    %v418 = vmax.f32 %v404, 0.0
    %v419 = vmax.f32 %v409, 0.0
    %v420 = vld [vmem:[%s5] sm:$0xff]
    %v421 = vld [vmem:[%s5 + $0x8] sm:$0xff]
    %v422 = vld [vmem:[%s5 + $0x10] sm:$0xff]
    %v423 = vld [vmem:[%s5 + $0x18] sm:$0xff]
    %v424 = vld [vmem:[%s5 + $0x20] sm:$0xff]
    %v425 = vld [vmem:[%s5 + $0x28] sm:$0xff]
    %v426 = vld [vmem:[%s5 + $0x30] sm:$0xff]
    %v427 = vld [vmem:[%s5 + $0x38] sm:$0xff]
    %429 = vset.pattern.permute.xlu0 0
    %430 = vperm.xlu0 %429, %v420
    %v431 = vpop.permute.xlu0 %430
    %434 = vset.pattern.permute.xlu0 0
    %435 = vperm.xlu0 %434, %v421
    %v436 = vpop.permute.xlu0 %435
    %439 = vset.pattern.permute.xlu0 0
    %440 = vperm.xlu0 %439, %v422
    %v441 = vpop.permute.xlu0 %440
    %444 = vset.pattern.permute.xlu0 0
    %445 = vperm.xlu0 %444, %v423
    %v446 = vpop.permute.xlu0 %445
    %449 = vset.pattern.permute.xlu0 0
    %450 = vperm.xlu0 %449, %v424
    %v451 = vpop.permute.xlu0 %450
    %454 = vset.pattern.permute.xlu0 0
    %455 = vperm.xlu0 %454, %v425
    %v456 = vpop.permute.xlu0 %455
    %459 = vset.pattern.permute.xlu0 0
    %460 = vperm.xlu0 %459, %v426
    %v461 = vpop.permute.xlu0 %460
    %464 = vset.pattern.permute.xlu0 0
    %465 = vperm.xlu0 %464, %v427
    %v466 = vpop.permute.xlu0 %465
    %v468 = vmul.f32 %v412, %v431
    %v469 = vmul.f32 %v413, %v436
    %v470 = vmul.f32 %v414, %v441
    %v471 = vmul.f32 %v415, %v446
    %v472 = vmul.f32 %v416, %v451
    %v473 = vmul.f32 %v417, %v456
    %v474 = vmul.f32 %v418, %v461
    %v475 = vmul.f32 %v419, %v466
    %v476 = vadd.f32 %v468, %v469
    %v477 = vadd.f32 %v476, %v470
    %v478 = vadd.f32 %v477, %v471
    %v479 = vadd.f32 %v478, %v472
    %v480 = vadd.f32 %v479, %v473
    %v481 = vadd.f32 %v480, %v474
    %v482 = vadd.f32 %v481, %v475
    %v483 = vrot.slane %v482, 4
    %v484 = vadd.f32 %v482, %v483
    %v485 = vrot.slane %v484, 2
    %v486 = vadd.f32 %v484, %v485
    %v487 = vrot.slane %v486, 1
    %v488 = vadd.f32 %v486, %v487
    %s489 = sld [smem:[#allocation2]]
    %v490 = vstv %s489
    %v491 = vadd.f32 %v488, %v490
    %492 = vst [vmem:[#allocation3] sm:$0x1] %v491
    // Predicated region
    $region30: #{tpu_custom_call.1} parent=1 // pred_check
      _
    $region31: #{tpu_custom_call.1} parent=1 // pred_check_branch
      %494 = sbr.rel (0) target = $region33
    $region32: #{tpu_custom_call.1} parent=1 // pred_region
      %s496 = ssub.s32 16, 16
      %497 = vsyncadd [#allocation4], %s496
      %s499 = sshll.u32 [#allocation3], 4
      %s500 = int_to_ptr.vmem [resolvable:$true] %s499
      %502 = dma.vmem_to_hbm [thread:$0]  %s500, 16, %s7, [#allocation4]
    $region33: #{tpu_custom_call.1} parent=1 // pred_fallthru
      _
    // Predicated region
    $region34: #{tpu_custom_call.1} parent=1 // pred_check
      _
    $region35: #{tpu_custom_call.1} parent=1 // pred_check_branch
      %504 = sbr.rel (0) target = $region37
    $region36: #{tpu_custom_call.1} parent=1 // pred_region
      %505 = dma.done [#allocation4], 16
    $region37: #{tpu_custom_call.1} parent=1 // pred_fallthru
      _
    %506 = vsyncpa [#allocation4], 1

// kernel: tpu_custom_call.1
$region0: #{tpu_custom_call.1}
  #allocation0 [shape = 'u32[]', space=smem, size = 0x4, offset = 0x4, fixed_abs, tag = 'smem constant byte address 0x4 - core index']
  #allocation1 [shape = 'u32[144,128]{1,0:T(1,128)}', space=vmem, size = 0x12000, scoped, tag = 'internal scratch']
  #allocation2 [shape = 'f32[1,1]{1,0:T(1,128)S(6)}', space=smem, size = 0x200, scoped, tag = 'scoped memory for tpu_custom_call.1']
  %s0 = inlined_call_operand.vmem [shape: f32[32,128], index: 0, kind: input, shape index: {}]
  %s1 = inlined_call_operand.vmem [shape: f32[64,32], index: 1, kind: input, shape index: {}]
  %s2 = inlined_call_operand.vmem [shape: f32[64,1], index: 2, kind: input, shape index: {}]
  %s3 = inlined_call_operand.vmem [shape: f32[64,64], index: 3, kind: input, shape index: {}]
  %s4 = inlined_call_operand.vmem [shape: f32[64,1], index: 4, kind: input, shape index: {}]
  %s5 = inlined_call_operand.vmem [shape: f32[64,1], index: 5, kind: input, shape index: {}]
  %s6 = inlined_call_operand.<no memory space> [shape: f32[1,1], index: 6, kind: input, shape index: {}]
  %s7 = inlined_call_operand.hbm [shape: f32[1,128], index: 7, kind: output, shape index: {}]
  %s8 = sld [smem:[#allocation0]]
  $region38: #{tpu_custom_call.1} parent=0
    _
  %s10 = ssub.s32 1, %s8
  %s11 = scalar_select 0, %s10, %s8
  %12 = sst [smem:[#allocation2]] %s6
  $region1: #{tpu_custom_call.1} parent=0
    #allocation3 [shape = 'u8[512]{0}', space=vmem, size = 0x400, scoped, tag = 'output window, operand 0, single buffered']
    #allocation4 [shape = 's32[1]{0}', space=sflag, size = 0x4, scoped, tag = 'scoped memory for tpu_custom_call.1']
    %13 = vsyncpa [#allocation4], 0
    // Predicated region
    $region2: #{tpu_custom_call.1} parent=1 // pred_check
      _
    $region3: #{tpu_custom_call.1} parent=1 // pred_check_branch
      %15 = sbr.rel (0) target = $region5
    $region4: #{tpu_custom_call.1} parent=1 // pred_region
      _
    $region5: #{tpu_custom_call.1} parent=1 // pred_fallthru
      _
    // Predicated region
    $region6: #{tpu_custom_call.1} parent=1 // pred_check
      _
    $region7: #{tpu_custom_call.1} parent=1 // pred_check_branch
      %17 = sbr.rel (0) target = $region9
    $region8: #{tpu_custom_call.1} parent=1 // pred_region
      _
    $region9: #{tpu_custom_call.1} parent=1 // pred_fallthru
      _
    // Predicated region
    $region10: #{tpu_custom_call.1} parent=1 // pred_check
      _
    $region11: #{tpu_custom_call.1} parent=1 // pred_check_branch
      %19 = sbr.rel (0) target = $region13
    $region12: #{tpu_custom_call.1} parent=1 // pred_region
      _
    $region13: #{tpu_custom_call.1} parent=1 // pred_fallthru
      _
    // Predicated region
    $region14: #{tpu_custom_call.1} parent=1 // pred_check
      _
    $region15: #{tpu_custom_call.1} parent=1 // pred_check_branch
      %21 = sbr.rel (0) target = $region17
    $region16: #{tpu_custom_call.1} parent=1 // pred_region
      _
    $region17: #{tpu_custom_call.1} parent=1 // pred_fallthru
      _
    // Predicated region
    $region18: #{tpu_custom_call.1} parent=1 // pred_check
      _
    $region19: #{tpu_custom_call.1} parent=1 // pred_check_branch
      %23 = sbr.rel (0) target = $region21
    $region20: #{tpu_custom_call.1} parent=1 // pred_region
      _
    $region21: #{tpu_custom_call.1} parent=1 // pred_fallthru
      _
    // Predicated region
    $region22: #{tpu_custom_call.1} parent=1 // pred_check
      _
    $region23: #{tpu_custom_call.1} parent=1 // pred_check_branch
      %25 = sbr.rel (0) target = $region25
    $region24: #{tpu_custom_call.1} parent=1 // pred_region
      _
    $region25: #{tpu_custom_call.1} parent=1 // pred_fallthru
      _
    // Predicated region
    $region26: #{tpu_custom_call.1} parent=1 // pred_check
      _
    $region27: #{tpu_custom_call.1} parent=1 // pred_check_branch
      %27 = sbr.rel (0) target = $region29
    $region28: #{tpu_custom_call.1} parent=1 // pred_region
      _
    $region29: #{tpu_custom_call.1} parent=1 // pred_fallthru
      _
    %v28 = vld [vmem:[%s1] sm:$0xff]
    %v29 = vld [vmem:[%s1 + $0x8] sm:$0xff]
    %v30 = vld [vmem:[%s1 + $0x10] sm:$0xff]
    %v31 = vld [vmem:[%s1 + $0x18] sm:$0xff]
    %v32 = vld [vmem:[%s1 + $0x20] sm:$0xff]
    %v33 = vld [vmem:[%s1 + $0x28] sm:$0xff]
    %v34 = vld [vmem:[%s1 + $0x30] sm:$0xff]
    %v35 = vld [vmem:[%s1 + $0x38] sm:$0xff]
    %v36 = vld [vmem:[%s0] sm:$0xff]
    %v37 = vld [vmem:[%s0 + $0x8] sm:$0xff]
    %v38 = vld [vmem:[%s0 + $0x10] sm:$0xff]
    %v39 = vld [vmem:[%s0 + $0x18] sm:$0xff]
    %v40 = vld [vmem:[%s2] sm:$0xff]
    %v41 = vld [vmem:[%s2 + $0x8] sm:$0xff]
    %v42 = vld [vmem:[%s2 + $0x10] sm:$0xff]
    %v43 = vld [vmem:[%s2 + $0x18] sm:$0xff]
    %v44 = vld [vmem:[%s2 + $0x20] sm:$0xff]
    %v45 = vld [vmem:[%s2 + $0x28] sm:$0xff]
    %v46 = vld [vmem:[%s2 + $0x30] sm:$0xff]
    %v47 = vld [vmem:[%s2 + $0x38] sm:$0xff]
    %49 = vset.pattern.permute.xlu0 0
    %50 = vperm.xlu0 %49, %v40
    %v51 = vpop.permute.xlu0 %50
    %54 = vset.pattern.permute.xlu0 0
    %55 = vperm.xlu0 %54, %v41
    %v56 = vpop.permute.xlu0 %55
    %59 = vset.pattern.permute.xlu0 0
    %60 = vperm.xlu0 %59, %v42
    %v61 = vpop.permute.xlu0 %60
    %64 = vset.pattern.permute.xlu0 0
    %65 = vperm.xlu0 %64, %v43
    %v66 = vpop.permute.xlu0 %65
    %69 = vset.pattern.permute.xlu0 0
    %70 = vperm.xlu0 %69, %v44
    %v71 = vpop.permute.xlu0 %70
    %74 = vset.pattern.permute.xlu0 0
    %75 = vperm.xlu0 %74, %v45
    %v76 = vpop.permute.xlu0 %75
    %79 = vset.pattern.permute.xlu0 0
    %80 = vperm.xlu0 %79, %v46
    %v81 = vpop.permute.xlu0 %80
    %84 = vset.pattern.permute.xlu0 0
    %85 = vperm.xlu0 %84, %v47
    %v86 = vpop.permute.xlu0 %85
    %vm88 = vcmask 261120
    %v90 = vsel %vm88, %v28, 0
    %v93 = vsel %vm88, %v29, 0
    %v96 = vsel %vm88, %v30, 0
    %v99 = vsel %vm88, %v31, 0
    %v102 = vsel %vm88, %v32, 0
    %v105 = vsel %vm88, %v33, 0
    %v108 = vsel %vm88, %v34, 0
    %v111 = vsel %vm88, %v35, 0
    %113 = vmatprep.subr.mxu0 0.0
    %114 = vmatpush1.msra.mxu0 %v36
    %115 = vmatprep.subr.mxu0 0.0
    %116 = vmatpush1.msra.mxu0 %v37
    %117 = vmatprep.subr.mxu0 0.0
    %118 = vmatpush1.msra.mxu0 %v38
    %119 = vmatprep.subr.mxu0 0.0
    %120 = vmatpush1.msra.mxu0 %v39
    %121 = vmatprep.subr.mxu0 0.0
    %122 = vmatpush1.msra.mxu0 0.0
    %123 = vmatprep.subr.mxu0 0.0
    %124 = vmatpush1.msra.mxu0 0.0
    %125 = vmatprep.subr.mxu0 0.0
    %126 = vmatpush1.msra.mxu0 0.0
    %127 = vmatprep.subr.mxu0 0.0
    %128 = vmatpush1.msra.mxu0 0.0
    %129 = vmatprep.subr.mxu0 0.0
    %130 = vmatpush1.msra.mxu0 0.0
    %131 = vmatprep.subr.mxu0 0.0
    %132 = vmatpush1.msra.mxu0 0.0
    %133 = vmatprep.subr.mxu0 0.0
    %134 = vmatpush1.msra.mxu0 0.0
    %135 = vmatprep.subr.mxu0 0.0
    %136 = vmatpush1.msra.mxu0 0.0
    %137 = vmatprep.subr.mxu0 0.0
    %138 = vmatpush1.msra.mxu0 0.0
    %139 = vmatprep.subr.mxu0 0.0
    %140 = vmatpush1.msra.mxu0 0.0
    %141 = vmatprep.subr.mxu0 0.0
    %142 = vmatpush1.msra.mxu0 0.0
    %143 = vmatprep.subr.mxu0 0.0
    %144 = vmatpush1.msra.mxu0 0.0
    %145 = vmatprep.subr.mxu0 0.0
    %146 = vmatpush1.msra.mxu0 0.0
    %147 = vmatprep.subr.mxu0 0.0
    %148 = vmatpush1.msra.mxu0 0.0
    %149 = vmatprep.subr.mxu0 0.0
    %150 = vmatpush1.msra.mxu0 0.0
    %151 = vmatprep.subr.mxu0 0.0
    %152 = vmatpush1.msra.mxu0 0.0
    %153 = vmatprep.subr.mxu0 0.0
    %154 = vmatpush1.msra.mxu0 0.0
    %155 = vmatprep.subr.mxu0 0.0
    %156 = vmatpush1.msra.mxu0 0.0
    %157 = vmatprep.subr.mxu0 0.0
    %158 = vmatpush1.msra.mxu0 0.0
    %159 = vmatprep.subr.mxu0 0.0
    %160 = vmatpush1.msra.mxu0 0.0
    %161 = vmatprep.subr.mxu0 0.0
    %162 = vmatpush1.msra.mxu0 0.0
    %163 = vmatprep.subr.mxu0 0.0
    %164 = vmatpush1.msra.mxu0 0.0
    %165 = vmatprep.subr.mxu0 0.0
    %166 = vmatpush1.msra.mxu0 0.0
    %167 = vmatprep.subr.mxu0 0.0
    %168 = vmatpush1.msra.mxu0 0.0
    %169 = vmatprep.subr.mxu0 0.0
    %170 = vmatpush1.msra.mxu0 0.0
    %171 = vmatprep.subr.mxu0 0.0
    %172 = vmatpush1.msra.mxu0 0.0
    %173 = vmatprep.subr.mxu0 0.0
    %174 = vmatpush1.msra.mxu0 0.0
    %175 = vmatprep.subr.mxu0 0.0
    %176 = vmatpush1.msra.mxu0 0.0
    %177 = vmatprep.mubr.f32.mxu0 0.0
    %178 = vmatmul.mubr.f32.gmra.mrb[0].mxu0 %v90
    %v179 = vpop.f32.mrb[0].mxu0
    %v180 = vadd.f32 %v51, %v179
    %v181 = vpop.f32.mrb[0].mxu0
    %182 = vmatprep.mubr.f32.mxu0 0.0
    %183 = vmatmul.mubr.f32.gmra.mrb[0].mxu0 %v93
    %v184 = vpop.f32.mrb[0].mxu0
    %v185 = vadd.f32 %v56, %v184
    %v186 = vpop.f32.mrb[0].mxu0
    %187 = vmatprep.mubr.f32.mxu0 0.0
    %188 = vmatmul.mubr.f32.gmra.mrb[0].mxu0 %v96
    %v189 = vpop.f32.mrb[0].mxu0
    %v190 = vadd.f32 %v61, %v189
    %v191 = vpop.f32.mrb[0].mxu0
    %192 = vmatprep.mubr.f32.mxu0 0.0
    %193 = vmatmul.mubr.f32.gmra.mrb[0].mxu0 %v99
    %v194 = vpop.f32.mrb[0].mxu0
    %v195 = vadd.f32 %v66, %v194
    %v196 = vpop.f32.mrb[0].mxu0
    %197 = vmatprep.mubr.f32.mxu0 0.0
    %198 = vmatmul.mubr.f32.gmra.mrb[0].mxu0 %v102
    %v199 = vpop.f32.mrb[0].mxu0
    %v200 = vadd.f32 %v71, %v199
    %v201 = vpop.f32.mrb[0].mxu0
    %202 = vmatprep.mubr.f32.mxu0 0.0
    %203 = vmatmul.mubr.f32.gmra.mrb[0].mxu0 %v105
    %v204 = vpop.f32.mrb[0].mxu0
    %v205 = vadd.f32 %v76, %v204
    %v206 = vpop.f32.mrb[0].mxu0
    %207 = vmatprep.mubr.f32.mxu0 0.0
    %208 = vmatmul.mubr.f32.gmra.mrb[0].mxu0 %v108
    %v209 = vpop.f32.mrb[0].mxu0
    %v210 = vadd.f32 %v81, %v209
    %v211 = vpop.f32.mrb[0].mxu0
    %212 = vmatprep.mubr.f32.mxu0 0.0
    %213 = vmatmul.mubr.f32.gmra.mrb[0].mxu0 %v111
    %v214 = vpop.f32.mrb[0].mxu0
    %v215 = vadd.f32 %v86, %v214
    %v216 = vpop.f32.mrb[0].mxu0
    %217 = vdwg.mxu0
    %v218 = vmax.f32 %v180, 0.0
    %v219 = vmax.f32 %v185, 0.0
    %v220 = vmax.f32 %v190, 0.0
    %v221 = vmax.f32 %v195, 0.0
    %v222 = vmax.f32 %v200, 0.0
    %v223 = vmax.f32 %v205, 0.0
    %v224 = vmax.f32 %v210, 0.0
    %v225 = vmax.f32 %v215, 0.0
    %v226 = vld [vmem:[%s3] sm:$0xff]
    %v227 = vld [vmem:[%s3 + $0x8] sm:$0xff]
    %v228 = vld [vmem:[%s3 + $0x10] sm:$0xff]
    %v229 = vld [vmem:[%s3 + $0x18] sm:$0xff]
    %v230 = vld [vmem:[%s3 + $0x20] sm:$0xff]
    %v231 = vld [vmem:[%s3 + $0x28] sm:$0xff]
    %v232 = vld [vmem:[%s3 + $0x30] sm:$0xff]
    %v233 = vld [vmem:[%s3 + $0x38] sm:$0xff]
    %v234 = vld [vmem:[%s4] sm:$0xff]
    %v235 = vld [vmem:[%s4 + $0x8] sm:$0xff]
    %v236 = vld [vmem:[%s4 + $0x10] sm:$0xff]
    %v237 = vld [vmem:[%s4 + $0x18] sm:$0xff]
    %v238 = vld [vmem:[%s4 + $0x20] sm:$0xff]
    %v239 = vld [vmem:[%s4 + $0x28] sm:$0xff]
    %v240 = vld [vmem:[%s4 + $0x30] sm:$0xff]
    %v241 = vld [vmem:[%s4 + $0x38] sm:$0xff]
    %243 = vset.pattern.permute.xlu0 0
    %244 = vperm.xlu0 %243, %v234
    %v245 = vpop.permute.xlu0 %244
    %248 = vset.pattern.permute.xlu0 0
    %249 = vperm.xlu0 %248, %v235
    %v250 = vpop.permute.xlu0 %249
    %253 = vset.pattern.permute.xlu0 0
    %254 = vperm.xlu0 %253, %v236
    %v255 = vpop.permute.xlu0 %254
    %258 = vset.pattern.permute.xlu0 0
    %259 = vperm.xlu0 %258, %v237
    %v260 = vpop.permute.xlu0 %259
    %263 = vset.pattern.permute.xlu0 0
    %264 = vperm.xlu0 %263, %v238
    %v265 = vpop.permute.xlu0 %264
    %268 = vset.pattern.permute.xlu0 0
    %269 = vperm.xlu0 %268, %v239
    %v270 = vpop.permute.xlu0 %269
    %273 = vset.pattern.permute.xlu0 0
    %274 = vperm.xlu0 %273, %v240
    %v275 = vpop.permute.xlu0 %274
    %278 = vset.pattern.permute.xlu0 0
    %279 = vperm.xlu0 %278, %v241
    %v280 = vpop.permute.xlu0 %279
    %vm282 = vcmask 523264
    %v284 = vsel %vm282, %v226, 0
    %v287 = vsel %vm282, %v227, 0
    %v290 = vsel %vm282, %v228, 0
    %v293 = vsel %vm282, %v229, 0
    %v296 = vsel %vm282, %v230, 0
    %v299 = vsel %vm282, %v231, 0
    %v302 = vsel %vm282, %v232, 0
    %v305 = vsel %vm282, %v233, 0
    %307 = vmatprep.subr.mxu0 0.0
    %308 = vmatpush1.msra.mxu0 %v218
    %309 = vmatprep.subr.mxu0 0.0
    %310 = vmatpush1.msra.mxu0 %v219
    %311 = vmatprep.subr.mxu0 0.0
    %312 = vmatpush1.msra.mxu0 %v220
    %313 = vmatprep.subr.mxu0 0.0
    %314 = vmatpush1.msra.mxu0 %v221
    %315 = vmatprep.subr.mxu0 0.0
    %316 = vmatpush1.msra.mxu0 %v222
    %317 = vmatprep.subr.mxu0 0.0
    %318 = vmatpush1.msra.mxu0 %v223
    %319 = vmatprep.subr.mxu0 0.0
    %320 = vmatpush1.msra.mxu0 %v224
    %321 = vmatprep.subr.mxu0 0.0
    %322 = vmatpush1.msra.mxu0 %v225
    %323 = vmatprep.subr.mxu0 0.0
    %324 = vmatpush1.msra.mxu0 0.0
    %325 = vmatprep.subr.mxu0 0.0
    %326 = vmatpush1.msra.mxu0 0.0
    %327 = vmatprep.subr.mxu0 0.0
    %328 = vmatpush1.msra.mxu0 0.0
    %329 = vmatprep.subr.mxu0 0.0
    %330 = vmatpush1.msra.mxu0 0.0
    %331 = vmatprep.subr.mxu0 0.0
    %332 = vmatpush1.msra.mxu0 0.0
    %333 = vmatprep.subr.mxu0 0.0
    %334 = vmatpush1.msra.mxu0 0.0
    %335 = vmatprep.subr.mxu0 0.0
    %336 = vmatpush1.msra.mxu0 0.0
    %337 = vmatprep.subr.mxu0 0.0
    %338 = vmatpush1.msra.mxu0 0.0
    %339 = vmatprep.subr.mxu0 0.0
    %340 = vmatpush1.msra.mxu0 0.0
    %341 = vmatprep.subr.mxu0 0.0
    %342 = vmatpush1.msra.mxu0 0.0
    %343 = vmatprep.subr.mxu0 0.0
    %344 = vmatpush1.msra.mxu0 0.0
    %345 = vmatprep.subr.mxu0 0.0
    %346 = vmatpush1.msra.mxu0 0.0
    %347 = vmatprep.subr.mxu0 0.0
    %348 = vmatpush1.msra.mxu0 0.0
    %349 = vmatprep.subr.mxu0 0.0
    %350 = vmatpush1.msra.mxu0 0.0
    %351 = vmatprep.subr.mxu0 0.0
    %352 = vmatpush1.msra.mxu0 0.0
    %353 = vmatprep.subr.mxu0 0.0
    %354 = vmatpush1.msra.mxu0 0.0
    %355 = vmatprep.subr.mxu0 0.0
    %356 = vmatpush1.msra.mxu0 0.0
    %357 = vmatprep.subr.mxu0 0.0
    %358 = vmatpush1.msra.mxu0 0.0
    %359 = vmatprep.subr.mxu0 0.0
    %360 = vmatpush1.msra.mxu0 0.0
    %361 = vmatprep.subr.mxu0 0.0
    %362 = vmatpush1.msra.mxu0 0.0
    %363 = vmatprep.subr.mxu0 0.0
    %364 = vmatpush1.msra.mxu0 0.0
    %365 = vmatprep.subr.mxu0 0.0
    %366 = vmatpush1.msra.mxu0 0.0
    %367 = vmatprep.subr.mxu0 0.0
    %368 = vmatpush1.msra.mxu0 0.0
    %369 = vmatprep.subr.mxu0 0.0
    %370 = vmatpush1.msra.mxu0 0.0
    %371 = vmatprep.mubr.f32.mxu0 0.0
    %372 = vmatmul.mubr.f32.gmra.mrb[0].mxu0 %v284
    %v373 = vpop.f32.mrb[0].mxu0
    %v374 = vadd.f32 %v245, %v373
    %v375 = vpop.f32.mrb[0].mxu0
    %376 = vmatprep.mubr.f32.mxu0 0.0
    %377 = vmatmul.mubr.f32.gmra.mrb[0].mxu0 %v287
    %v378 = vpop.f32.mrb[0].mxu0
    %v379 = vadd.f32 %v250, %v378
    %v380 = vpop.f32.mrb[0].mxu0
    %381 = vmatprep.mubr.f32.mxu0 0.0
    %382 = vmatmul.mubr.f32.gmra.mrb[0].mxu0 %v290
    %v383 = vpop.f32.mrb[0].mxu0
    %v384 = vadd.f32 %v255, %v383
    %v385 = vpop.f32.mrb[0].mxu0
    %386 = vmatprep.mubr.f32.mxu0 0.0
    %387 = vmatmul.mubr.f32.gmra.mrb[0].mxu0 %v293
    %v388 = vpop.f32.mrb[0].mxu0
    %v389 = vadd.f32 %v260, %v388
    %v390 = vpop.f32.mrb[0].mxu0
    %391 = vmatprep.mubr.f32.mxu0 0.0
    %392 = vmatmul.mubr.f32.gmra.mrb[0].mxu0 %v296
    %v393 = vpop.f32.mrb[0].mxu0
    %v394 = vadd.f32 %v265, %v393
    %v395 = vpop.f32.mrb[0].mxu0
    %396 = vmatprep.mubr.f32.mxu0 0.0
    %397 = vmatmul.mubr.f32.gmra.mrb[0].mxu0 %v299
    %v398 = vpop.f32.mrb[0].mxu0
    %v399 = vadd.f32 %v270, %v398
    %v400 = vpop.f32.mrb[0].mxu0
    %401 = vmatprep.mubr.f32.mxu0 0.0
    %402 = vmatmul.mubr.f32.gmra.mrb[0].mxu0 %v302
    %v403 = vpop.f32.mrb[0].mxu0
    %v404 = vadd.f32 %v275, %v403
    %v405 = vpop.f32.mrb[0].mxu0
    %406 = vmatprep.mubr.f32.mxu0 0.0
    %407 = vmatmul.mubr.f32.gmra.mrb[0].mxu0 %v305
    %v408 = vpop.f32.mrb[0].mxu0
    %v409 = vadd.f32 %v280, %v408
    %v410 = vpop.f32.mrb[0].mxu0
    %411 = vdwg.mxu0
    %v412 = vmax.f32 %v374, 0.0
    %v413 = vmax.f32 %v379, 0.0
    %v414 = vmax.f32 %v384, 0.0
    %v415 = vmax.f32 %v389, 0.0
    %v416 = vmax.f32 %v394, 0.0
    %v417 = vmax.f32 %v399, 0.0
    %v418 = vmax.f32 %v404, 0.0
    %v419 = vmax.f32 %v409, 0.0
    %v420 = vld [vmem:[%s5] sm:$0xff]
    %v421 = vld [vmem:[%s5 + $0x8] sm:$0xff]
    %v422 = vld [vmem:[%s5 + $0x10] sm:$0xff]
    %v423 = vld [vmem:[%s5 + $0x18] sm:$0xff]
    %v424 = vld [vmem:[%s5 + $0x20] sm:$0xff]
    %v425 = vld [vmem:[%s5 + $0x28] sm:$0xff]
    %v426 = vld [vmem:[%s5 + $0x30] sm:$0xff]
    %v427 = vld [vmem:[%s5 + $0x38] sm:$0xff]
    %429 = vset.pattern.permute.xlu0 0
    %430 = vperm.xlu0 %429, %v420
    %v431 = vpop.permute.xlu0 %430
    %434 = vset.pattern.permute.xlu0 0
    %435 = vperm.xlu0 %434, %v421
    %v436 = vpop.permute.xlu0 %435
    %439 = vset.pattern.permute.xlu0 0
    %440 = vperm.xlu0 %439, %v422
    %v441 = vpop.permute.xlu0 %440
    %444 = vset.pattern.permute.xlu0 0
    %445 = vperm.xlu0 %444, %v423
    %v446 = vpop.permute.xlu0 %445
    %449 = vset.pattern.permute.xlu0 0
    %450 = vperm.xlu0 %449, %v424
    %v451 = vpop.permute.xlu0 %450
    %454 = vset.pattern.permute.xlu0 0
    %455 = vperm.xlu0 %454, %v425
    %v456 = vpop.permute.xlu0 %455
    %459 = vset.pattern.permute.xlu0 0
    %460 = vperm.xlu0 %459, %v426
    %v461 = vpop.permute.xlu0 %460
    %464 = vset.pattern.permute.xlu0 0
    %465 = vperm.xlu0 %464, %v427
    %v466 = vpop.permute.xlu0 %465
    %v468 = vmul.f32 %v412, %v431
    %v469 = vmul.f32 %v413, %v436
    %v470 = vmul.f32 %v414, %v441
    %v471 = vmul.f32 %v415, %v446
    %v472 = vmul.f32 %v416, %v451
    %v473 = vmul.f32 %v417, %v456
    %v474 = vmul.f32 %v418, %v461
    %v475 = vmul.f32 %v419, %v466
    %v476 = vadd.f32 %v468, %v469
    %v477 = vadd.f32 %v476, %v470
    %v478 = vadd.f32 %v477, %v471
    %v479 = vadd.f32 %v478, %v472
    %v480 = vadd.f32 %v479, %v473
    %v481 = vadd.f32 %v480, %v474
    %v482 = vadd.f32 %v481, %v475
    %v483 = vrot.slane %v482, 4
    %v484 = vadd.f32 %v482, %v483
    %v485 = vrot.slane %v484, 2
    %v486 = vadd.f32 %v484, %v485
    %v487 = vrot.slane %v486, 1
    %v488 = vadd.f32 %v486, %v487
    %s489 = sld [smem:[#allocation2]]
    %v490 = vstv %s489
    %v491 = vadd.f32 %v488, %v490
    %492 = vst [vmem:[#allocation3] sm:$0x1] %v491
    // Predicated region
    $region30: #{tpu_custom_call.1} parent=1 // pred_check
      _
    $region31: #{tpu_custom_call.1} parent=1 // pred_check_branch
      %494 = sbr.rel (0) target = $region33
    $region32: #{tpu_custom_call.1} parent=1 // pred_region
      %s496 = ssub.s32 16, 16
      %497 = vsyncadd [#allocation4], %s496
      %s499 = sshll.u32 [#allocation3], 4
      %s500 = int_to_ptr.vmem [resolvable:$true] %s499
      %502 = dma.vmem_to_hbm [thread:$0]  %s500, 16, %s7, [#allocation4]
    $region33: #{tpu_custom_call.1} parent=1 // pred_fallthru
      _
    // Predicated region
    $region34: #{tpu_custom_call.1} parent=1 // pred_check
      _
    $region35: #{tpu_custom_call.1} parent=1 // pred_check_branch
      %504 = sbr.rel (0) target = $region37
    $region36: #{tpu_custom_call.1} parent=1 // pred_region
      %505 = dma.done [#allocation4], 16
    $region37: #{tpu_custom_call.1} parent=1 // pred_fallthru
      _
    %506 = vsyncpa [#allocation4], 1

</llo_original>
